<compile_context>
chip_gen: v6e
topology: v6e:2x2x1
jax: 0.10.0
libtpu: 0.0.40
codegen_flags: <defaults>
</compile_context>

<pallas_src>
import jax
import jax.numpy as jnp
from jax.experimental import pallas as pl
from jax.experimental.pallas import tpu as pltpu


def _frozen_bn_kernel(x_ref, s_ref, b_ref, o_ref):
    # x_ref: (tm, tk) tile; s_ref/b_ref: (tm, 1) or (1, tk) f32 params.
    x32 = x_ref[...].astype(jnp.float32)
    o_ref[...] = (x32 * s_ref[...] + b_ref[...]).astype(o_ref.dtype)


def _block_budget_bytes():
    """Per-block byte budget, generation-aware (v7x has only 64 MiB VMEM/TC)."""
    try:
        info = pltpu.get_tpu_info()
        vmem = getattr(info, "vmem_capacity_bytes", 64 << 20)
    except Exception:  # pragma: no cover - conservative fallback
        vmem = 64 << 20
    return (2 << 20) if vmem <= (64 << 20) else (4 << 20)


def _choose_tiles(M, K, itemsize, budget_bytes, max_tk):
    """Pick (tm, tk): tk = K or near-equal 128-multiple splits; tm rounds to
    the dtype-native sublane tile (8 f32 / 16 bf16 / 32 int8)."""
    sub = max(8, 32 // max(itemsize, 1))
    budget = max(budget_bytes // max(itemsize, 1), 8 * 128)
    min_rows = min(M, sub)

    # Lane (last) dim: full width whenever a minimal row block fits the budget,
    # otherwise near-equal 128-multiple chunks (dense stores, no ragged 2048).
    if K <= max_tk and (K * min_rows <= budget or K <= 128):
        tk = K
    else:
        k_vregs = pl.cdiv(K, 128)
        n_splits = max(pl.cdiv(K * min_rows, budget), pl.cdiv(K, max_tk), 1)
        n_splits = min(n_splits, k_vregs)
        tk = 128 * pl.cdiv(k_vregs, n_splits)

    # Sublane (row) dim: multiple of the dtype-native tile, or the full M.
    tm = max(1, budget // max(tk, 1))
    if M <= sub:
        tm = M
    else:
        tm = max(sub, (min(tm, M, 4096) // sub) * sub)
    return tm, tk


def _vmem_limit_bytes(tm, tk, itemsize, lane_layout):
    """Right-size the scoped VMEM limit: double-buffered in/out blocks + both
    (padded) param buffers, with generous slack."""
    pad128 = lambda v: -(-v // 128) * 128
    pad8 = lambda v: -(-v // 8) * 8
    x_blk = pad8(tm) * pad128(tk) * itemsize
    p_blk = (8 * pad128(tk) * 4) if lane_layout else (pad8(tm) * 128 * 4)
    needed = 4 * x_blk + 4 * p_blk
    return int(min(max(2 * needed + (4 << 20), 24 << 20), 100 << 20))


def frozen_batch_norm_2d(x_nchw, weight, bias, running_mean, running_var, *, eps=1e-5):
    """x_nchw: (N, C, H, W); per-channel params: (C,). Returns same shape/dtype."""
    N, C, H, W = x_nchw.shape
    HW = H * W
    f32 = jnp.float32

    # Fold the frozen-BN affine once, in float32 (C elements of math).
    scale = weight.astype(f32) * jax.lax.rsqrt(running_var.astype(f32) + eps)
    shift = bias.astype(f32) - running_mean.astype(f32) * scale

    itemsize = jnp.dtype(x_nchw.dtype).itemsize
    budget = _block_budget_bytes()
    lane_layout = (HW % 128) != 0

    if not lane_layout:
        # (N*C, H*W): lane axis already dense; params are tiny (M,1) columns.
        M, K = N * C, HW
        x2d = x_nchw.reshape(M, K)
        s_arr = jnp.tile(scale, N).reshape(M, 1)   # f32, row r -> channel r % C
        b_arr = jnp.tile(shift, N).reshape(M, 1)
        tm, tk = _choose_tiles(M, K, itemsize, budget, max_tk=65536)
        grid = (pl.cdiv(M, tm), pl.cdiv(K, tk))
        x_spec = pl.BlockSpec((tm, tk), lambda i, j: (i, j))
        p_spec = pl.BlockSpec((tm, 1), lambda i, j: (i, 0))
        o_spec = pl.BlockSpec((tm, tk), lambda i, j: (i, j))
    else:
        # H*W not a 128-multiple (e.g. 196, 49): fold C into the lane axis so
        # stores are unmasked full-width; params become per-lane f32 vectors.
        M, K = N, C * HW
        x2d = x_nchw.reshape(M, K)
        s_arr = jnp.repeat(scale, HW).reshape(1, K)   # lane k -> channel k // HW
        b_arr = jnp.repeat(shift, HW).reshape(1, K)
        # Cap tk so the (sublane-padded) param double-buffers stay small.
        tm, tk = _choose_tiles(M, K, itemsize, budget, max_tk=32768)
        # Lane axis OUTER, row axis INNER: param block index is constant across
        # consecutive steps -> fetched once per lane block, not per row block.
        grid = (pl.cdiv(K, tk), pl.cdiv(M, tm))
        x_spec = pl.BlockSpec((tm, tk), lambda j, i: (i, j))
        p_spec = pl.BlockSpec((1, tk), lambda j, i: (0, j))
        o_spec = pl.BlockSpec((tm, tk), lambda j, i: (i, j))

    out2d = pl.pallas_call(
        _frozen_bn_kernel,
        out_shape=jax.ShapeDtypeStruct((M, K), x2d.dtype),
        grid_spec=pltpu.PrefetchScalarGridSpec(
            num_scalar_prefetch=0,
            grid=grid,
            in_specs=[x_spec, p_spec, p_spec],
            out_specs=o_spec,
        ),
        compiler_params=pltpu.CompilerParams(
            # Both axes parallel: lets v7x shard across its two TensorCores.
            dimension_semantics=("parallel", "parallel"),
            vmem_limit_bytes=_vmem_limit_bytes(tm, tk, itemsize, lane_layout),
        ),
    )(x2d, s_arr, b_arr)

    return out2d.reshape(N, C, H, W)


if __name__ == "__main__":
    key = jax.random.PRNGKey(0)

    def ref_fbn(x, w, b, rm, rv, eps=1e-5):
        f32 = jnp.float32
        sc = (w.astype(f32) * jax.lax.rsqrt(rv.astype(f32) + eps)).reshape(1, -1, 1, 1)
        sh = b.astype(f32).reshape(1, -1, 1, 1) - rm.astype(f32).reshape(1, -1, 1, 1) * sc
        return (x.astype(f32) * sc + sh).astype(x.dtype)

    def make_inputs(k, N, C, H, W, dtype):
        kx, kw, kb, km, kv = jax.random.split(k, 5)
        x = jax.random.normal(kx, (N, C, H, W), dtype=jnp.float32).astype(dtype)
        w = 1.0 + 0.1 * jax.random.normal(kw, (C,), dtype=jnp.float32)
        b = 0.1 * jax.random.normal(kb, (C,), dtype=jnp.float32)
        rm = 0.05 * jax.random.normal(km, (C,), dtype=jnp.float32)
        rv = jnp.abs(1.0 + 0.1 * jax.random.normal(kv, (C,), dtype=jnp.float32))
        return x, w, b, rm, rv

    cases = [
        # (N, C, H, W, dtype, tol)
        (2, 4, 16, 16, jnp.float32, 1e-5),    # H*W % 128 == 0 -> row layout
        (2, 4, 7, 7, jnp.float32, 1e-5),      # H*W = 49       -> lane-dense layout
        (2, 4, 16, 16, jnp.bfloat16, 5e-2),   # bf16 activations, f32 folded math
        (2, 2200, 16, 16, jnp.float32, 1e-5), # multi-block rows + ragged M tail
        (2, 1030, 7, 7, jnp.float32, 1e-5),   # lane layout with K split + ragged tail
    ]
    keys = jax.random.split(key, len(cases))
    for k, (N, C, H, W, dtype, tol) in zip(keys, cases):
        x, w, b, rm, rv = make_inputs(k, N, C, H, W, dtype)
        out = jax.block_until_ready(frozen_batch_norm_2d(x, w, b, rm, rv))
        ref = ref_fbn(x, w, b, rm, rv)
        assert out.shape == x.shape and out.dtype == x.dtype, (N, C, H, W, dtype)
        assert jnp.allclose(out.astype(jnp.float32), ref.astype(jnp.float32),
                            atol=tol, rtol=tol), (N, C, H, W, dtype)

    print("KERNEL_OK")
</pallas_src>

<mosaic_0001>
module attributes {stable_mosaic.version = 11 : i64} {
  func.func @_frozen_bn_kernel(%arg0: i32, %arg1: i32, %arg2: memref<8x256xf32, #tpu.memory_space<vmem>>, %arg3: memref<8x1xf32, #tpu.memory_space<vmem>>, %arg4: memref<8x1xf32, #tpu.memory_space<vmem>>, %arg5: memref<8x256xf32, #tpu.memory_space<vmem>>) attributes {dimension_semantics = [#tpu.dimension_semantics<parallel>, #tpu.dimension_semantics<parallel>], iteration_bounds = array<i64: 1, 1>, scalar_prefetch = 0 : i64, scratch_operands = 0 : i64, tpu.core_type = #tpu.core_type<tc>, window_params = [{transform_indices = @transform_0, window_bounds = array<i64: 8, 256>}, {transform_indices = @transform_1, window_bounds = array<i64: 8, 1>}, {transform_indices = @transform_2, window_bounds = array<i64: 8, 1>}, {transform_indices = @transform_3, window_bounds = array<i64: 8, 256>}]} {
    %c0 = arith.constant 0 : index
    %c0_0 = arith.constant 0 : index
    %0 = vector.load %arg2[%c0, %c0_0] : memref<8x256xf32, #tpu.memory_space<vmem>>, vector<8x256xf32>
    %c0_1 = arith.constant 0 : index
    %c0_2 = arith.constant 0 : index
    %1 = vector.load %arg3[%c0_1, %c0_2] : memref<8x1xf32, #tpu.memory_space<vmem>>, vector<8x1xf32>
    %2 = vector.broadcast %1 : vector<8x1xf32> to vector<8x256xf32>
    %3 = arith.mulf %0, %2 : vector<8x256xf32>
    %c0_3 = arith.constant 0 : index
    %c0_4 = arith.constant 0 : index
    %4 = vector.load %arg4[%c0_3, %c0_4] : memref<8x1xf32, #tpu.memory_space<vmem>>, vector<8x1xf32>
    %5 = vector.broadcast %4 : vector<8x1xf32> to vector<8x256xf32>
    %6 = arith.addf %3, %5 : vector<8x256xf32>
    %c0_5 = arith.constant 0 : index
    %c0_6 = arith.constant 0 : index
    %7 = vector.load %arg5[%c0_5, %c0_6] : memref<8x256xf32, #tpu.memory_space<vmem>>, vector<8x256xf32>
    tpu.vector_store %arg5[%c0_5, %c0_6], %6 {strides = array<i32>} : memref<8x256xf32, #tpu.memory_space<vmem>>, vector<8x256xf32>,
    return
  }
  func.func @transform_0(%arg0: i32, %arg1: i32) -> (i32, i32) {
    %c0_i32 = arith.constant 0 : i32
    return %arg0, %arg1 : i32, i32
  }
  func.func @transform_1(%arg0: i32, %arg1: i32) -> (i32, i32) {
    %c0_i32 = arith.constant 0 : i32
    %c0_i32_0 = arith.constant 0 : i32
    return %arg0, %c0_i32 : i32, i32
  }
  func.func @transform_2(%arg0: i32, %arg1: i32) -> (i32, i32) {
    %c0_i32 = arith.constant 0 : i32
    %c0_i32_0 = arith.constant 0 : i32
    return %arg0, %c0_i32 : i32, i32
  }
  func.func @transform_3(%arg0: i32, %arg1: i32) -> (i32, i32) {
    %c0_i32 = arith.constant 0 : i32
    return %arg0, %arg1 : i32, i32
  }
}

</mosaic_0001>

<llo_original>
// kernel: tpu_custom_call.1
$region0: #{tpu_custom_call.1}
  #allocation0 [shape = 'u32[]', space=smem, size = 0x4, offset = 0x4, fixed_abs, tag = 'smem constant byte address 0x4 - core index']
  #allocation1 [shape = 'u32[144,128]{1,0:T(1,128)}', space=vmem, size = 0x12000, scoped, tag = 'internal scratch']
  %s0 = inlined_call_operand.vmem [shape: f32[8,256], index: 0, kind: input, shape index: {}]
  %s1 = inlined_call_operand.vmem [shape: f32[8,1], index: 1, kind: input, shape index: {}]
  %s2 = inlined_call_operand.vmem [shape: f32[8,1], index: 2, kind: input, shape index: {}]
  %s3 = inlined_call_operand.hbm [shape: f32[8,256], index: 3, kind: output, shape index: {}]
  %s4 = sld [smem:[#allocation0]]
  $region22: #{tpu_custom_call.1} parent=0
    _
  %s6 = ssub.s32 1, %s4
  %s7 = scalar_select 0, %s6, %s4
  $region1: #{tpu_custom_call.1} parent=0
    #allocation2 [shape = 'u8[8192]{0}', space=vmem, size = 0x2000, scoped, tag = 'output window, operand 0, single buffered']
    #allocation3 [shape = 's32[1]{0}', space=sflag, size = 0x4, scoped, tag = 'scoped memory for tpu_custom_call.1']
    %8 = vsyncpa [#allocation3], 0
    // Predicated region
    $region2: #{tpu_custom_call.1} parent=1 // pred_check
      _
    $region3: #{tpu_custom_call.1} parent=1 // pred_check_branch
      %10 = sbr.rel (0) target = $region5
    $region4: #{tpu_custom_call.1} parent=1 // pred_region
      _
    $region5: #{tpu_custom_call.1} parent=1 // pred_fallthru
      _
    // Predicated region
    $region6: #{tpu_custom_call.1} parent=1 // pred_check
      _
    $region7: #{tpu_custom_call.1} parent=1 // pred_check_branch
      %12 = sbr.rel (0) target = $region9
    $region8: #{tpu_custom_call.1} parent=1 // pred_region
      _
    $region9: #{tpu_custom_call.1} parent=1 // pred_fallthru
      _
    // Predicated region
    $region10: #{tpu_custom_call.1} parent=1 // pred_check
      _
    $region11: #{tpu_custom_call.1} parent=1 // pred_check_branch
      %14 = sbr.rel (0) target = $region13
    $region12: #{tpu_custom_call.1} parent=1 // pred_region
      _
    $region13: #{tpu_custom_call.1} parent=1 // pred_fallthru
      _
    %v15 = vld [vmem:[%s0] sm:$0xff]
    %v16 = vld [vmem:[%s0 + $0x8] sm:$0xff]
    %v17 = vld [vmem:[%s1] sm:$0xff]
    %19 = vset.pattern.permute.xlu0 0
    %20 = vperm.xlu0 %19, %v17
    %v21 = vpop.permute.xlu0 %20
    %v23 = vmul.f32 %v15, %v21
    %v24 = vmul.f32 %v16, %v21
    %v25 = vld [vmem:[%s2] sm:$0xff]
    %27 = vset.pattern.permute.xlu0 0
    %28 = vperm.xlu0 %27, %v25
    %v29 = vpop.permute.xlu0 %28
    %v31 = vadd.f32 %v23, %v29
    %v32 = vadd.f32 %v24, %v29
    %33 = vst [vmem:[#allocation2] sm:$0xff] %v31
    %34 = vst [vmem:[#allocation2 + $0x8] sm:$0xff] %v32
    // Predicated region
    $region14: #{tpu_custom_call.1} parent=1 // pred_check
      _
    $region15: #{tpu_custom_call.1} parent=1 // pred_check_branch
      %36 = sbr.rel (0) target = $region17
    $region16: #{tpu_custom_call.1} parent=1 // pred_region
      %s38 = ssub.s32 256, 256
      %39 = vsyncadd [#allocation3], %s38
      %s41 = sshll.u32 [#allocation2], 4
      %s42 = int_to_ptr.vmem [resolvable:$true] %s41
      %44 = dma.vmem_to_hbm [thread:$0]  %s42, 256, %s3, [#allocation3]
    $region17: #{tpu_custom_call.1} parent=1 // pred_fallthru
      _
    // Predicated region
    $region18: #{tpu_custom_call.1} parent=1 // pred_check
      _
    $region19: #{tpu_custom_call.1} parent=1 // pred_check_branch
      %46 = sbr.rel (0) target = $region21
    $region20: #{tpu_custom_call.1} parent=1 // pred_region
      %47 = dma.done [#allocation3], 256
    $region21: #{tpu_custom_call.1} parent=1 // pred_fallthru
      _
    %48 = vsyncpa [#allocation3], 1

</llo_original>
